<compile_context>
chip_gen: v6e
topology: v6e:2x2x1
jax: 0.10.0
libtpu: 0.0.40
codegen_flags: <defaults>
</compile_context>

<pallas_src>
import jax
import jax.numpy as jnp
from jax.experimental import pallas as pl
from jax.experimental.pallas import tpu as pltpu

HIDDEN = 30  # fixed by CNet.__init__


def cnet_kernel(x_ref, w_ref, aux_ref, out_ref):
    # Fused input projection: [s, a] @ [Ws; Wa]  -> one MXU matmul.
    h = jnp.dot(x_ref[...], w_ref[...], preferred_element_type=jnp.float32)

    aux = aux_ref[...]            # (3, HIDDEN) packed small params (one load)
    b_row = aux[0:1, :]           # fused bias  bs + ba            (1, HIDDEN)
    wo_row = aux[1:2, :]          # out-layer weight as a row      (1, HIDDEN)
    bo = aux[2:3, 0:1]            # out-layer bias                 (1, 1)

    # net = relu(fcs(s) + fca(a))
    net = jnp.maximum(h + b_row, 0.0)

    # actions_value = net @ wo + bo, done on the VPU/XLU:
    # elementwise multiply + cross-lane reduction (keeps the MXU out of the
    # critical path for a 1-wide projection).
    out_ref[...] = jnp.sum(net * wo_row, axis=-1, keepdims=True) + bo


def cnet_forward(s, a, packed_params):
    """CNet forward. s: (B, s_dim), a: (B, a_dim) -> (B, 1)."""
    w_fused, aux = packed_params
    x = jnp.concatenate([s, a], axis=-1)  # (B, s_dim + a_dim)
    B = x.shape[0]
    vmem = pl.BlockSpec(memory_space=pltpu.MemorySpace.VMEM)
    return pl.pallas_call(
        cnet_kernel,
        out_shape=jax.ShapeDtypeStruct((B, 1), jnp.float32),
        in_specs=[vmem, vmem, vmem],
        out_specs=vmem,
    )(x, w_fused, aux)


def init_cnet_params(key, s_dim, a_dim):
    """Deterministic per-layer init mirroring CNet.__init__.

    Weights ~ N(0, 0.1) (as in .normal_(0, 0.1)); biases use PyTorch's
    default uniform(-1/sqrt(fan_in), 1/sqrt(fan_in)) init.
    Weights stored as (in_features, out_features), i.e. transposed vs
    nn.Linear storage; semantics identical (y = x @ W + b).
    """
    k = jax.random.split(key, 6)
    ws = 0.1 * jax.random.normal(k[0], (s_dim, HIDDEN), jnp.float32)
    wa = 0.1 * jax.random.normal(k[1], (a_dim, HIDDEN), jnp.float32)
    wo = 0.1 * jax.random.normal(k[2], (HIDDEN, 1), jnp.float32)
    bs = jax.random.uniform(k[3], (1, HIDDEN), jnp.float32,
                            -1.0 / jnp.sqrt(s_dim), 1.0 / jnp.sqrt(s_dim))
    ba = jax.random.uniform(k[4], (1, HIDDEN), jnp.float32,
                            -1.0 / jnp.sqrt(a_dim), 1.0 / jnp.sqrt(a_dim))
    bo = jax.random.uniform(k[5], (1, 1), jnp.float32,
                            -1.0 / jnp.sqrt(HIDDEN), 1.0 / jnp.sqrt(HIDDEN))
    return ws, bs, wa, ba, wo, bo


def pack_cnet_params(params):
    """One-time fusion of the per-layer params into 2 kernel operands."""
    ws, bs, wa, ba, wo, bo = params
    w_fused = jnp.concatenate([ws, wa], axis=0)          # (s_dim+a_dim, HIDDEN)
    aux = jnp.concatenate([
        bs + ba,                                          # row 0: fused bias
        wo.T,                                             # row 1: out weight row
        jnp.full((1, HIDDEN), bo[0, 0], jnp.float32),     # row 2: out bias (col 0 used)
    ], axis=0)                                            # (3, HIDDEN)
    return w_fused, aux


if __name__ == "__main__":
    key = jax.random.PRNGKey(0)
    k_s, k_a, k_p = jax.random.split(key, 3)

    B, S_DIM, A_DIM = 8, 16, 4
    s = jax.random.normal(k_s, (B, S_DIM), jnp.float32)
    a = jax.random.normal(k_a, (B, A_DIM), jnp.float32)
    params = init_cnet_params(k_p, S_DIM, A_DIM)
    packed = pack_cnet_params(params)

    out = cnet_forward(s, a, packed)
    out = jax.block_until_ready(out)

    # Pure-JAX reference using the ORIGINAL (unfused) per-layer params — also
    # validates that the fusion preserves the module's semantics.
    ws, bs, wa, ba, wo, bo = params
    ref = jnp.maximum(s @ ws + bs + a @ wa + ba, 0.0) @ wo + bo
    assert out.shape == (B, 1)
    assert jnp.allclose(out, ref, atol=1e-5), "mismatch vs reference"

    print("KERNEL_OK")
</pallas_src>

<mosaic_0001>
module attributes {stable_mosaic.version = 11 : i64} {
  func.func @cnet_kernel(%arg0: memref<8x20xf32, #tpu.memory_space<vmem>>, %arg1: memref<20x30xf32, #tpu.memory_space<vmem>>, %arg2: memref<3x30xf32, #tpu.memory_space<vmem>>, %arg3: memref<8x1xf32, #tpu.memory_space<vmem>>) attributes {dimension_semantics = [], scalar_prefetch = 0 : i64, scratch_operands = 0 : i64, tpu.core_type = #tpu.core_type<tc>} {
    %c0 = arith.constant 0 : index
    %c0_0 = arith.constant 0 : index
    %0 = vector.load %arg0[%c0, %c0_0] : memref<8x20xf32, #tpu.memory_space<vmem>>, vector<8x20xf32>
    %c0_1 = arith.constant 0 : index
    %c0_2 = arith.constant 0 : index
    %1 = vector.load %arg1[%c0_1, %c0_2] : memref<20x30xf32, #tpu.memory_space<vmem>>, vector<20x30xf32>
    %cst = arith.constant dense<0.000000e+00> : vector<8x30xf32>
    %2 = tpu.matmul %0, %1, %cst {dimension_numbers = #tpu.dot_dimension_numbers<[1], [0], [0], [1], [0, 0, 1, 1], [], []>} : vector<8x20xf32>, vector<20x30xf32>, vector<8x30xf32> -> vector<8x30xf32>
    %c0_3 = arith.constant 0 : index
    %c0_4 = arith.constant 0 : index
    %3 = vector.load %arg2[%c0_3, %c0_4] : memref<3x30xf32, #tpu.memory_space<vmem>>, vector<3x30xf32>
    %4 = vector.extract_strided_slice %3 {offsets = [0, 0], sizes = [1, 30], strides = [1, 1]} : vector<3x30xf32> to vector<1x30xf32>
    %5 = vector.extract_strided_slice %3 {offsets = [1, 0], sizes = [1, 30], strides = [1, 1]} : vector<3x30xf32> to vector<1x30xf32>
    %6 = vector.extract_strided_slice %3 {offsets = [2, 0], sizes = [1, 1], strides = [1, 1]} : vector<3x30xf32> to vector<1x1xf32>
    %7 = vector.broadcast %4 : vector<1x30xf32> to vector<8x30xf32>
    %8 = arith.addf %2, %7 : vector<8x30xf32>
    %cst_5 = arith.constant 0.000000e+00 : f32
    %9 = vector.broadcast %cst_5 : f32 to vector<8x30xf32>
    %10 = arith.maximumf %8, %9 : vector<8x30xf32>
    %11 = vector.broadcast %5 : vector<1x30xf32> to vector<8x30xf32>
    %12 = arith.mulf %10, %11 : vector<8x30xf32>
    %cst_6 = arith.constant dense<0.000000e+00> : vector<8xf32>
    %13 = vector.multi_reduction <add>, %12, %cst_6 [1] : vector<8x30xf32> to vector<8xf32>
    %14 = vector.shape_cast %13 : vector<8xf32> to vector<8x1xf32>
    %15 = vector.broadcast %6 : vector<1x1xf32> to vector<8x1xf32>
    %16 = arith.addf %14, %15 : vector<8x1xf32>
    %c0_7 = arith.constant 0 : index
    %c0_8 = arith.constant 0 : index
    %17 = vector.load %arg3[%c0_7, %c0_8] : memref<8x1xf32, #tpu.memory_space<vmem>>, vector<8x1xf32>
    tpu.vector_store %arg3[%c0_7, %c0_8], %16 {strides = array<i32>} : memref<8x1xf32, #tpu.memory_space<vmem>>, vector<8x1xf32>,
    return
  }
}

</mosaic_0001>

<llo_original>
// kernel: tpu_custom_call.1
$region0: #{tpu_custom_call.1}
  #allocation0 [shape = 'u32[]', space=smem, size = 0x4, offset = 0x4, fixed_abs, tag = 'smem constant byte address 0x4 - core index']
  #allocation1 [shape = 'u32[144,128]{1,0:T(1,128)}', space=vmem, size = 0x12000, scoped, tag = 'internal scratch']
  %s0 = inlined_call_operand.hbm [shape: f32[8,20], index: 0, kind: input, shape index: {}]
  %s1 = inlined_call_operand.hbm [shape: f32[20,30], index: 1, kind: input, shape index: {}]
  %s2 = inlined_call_operand.hbm [shape: f32[3,30], index: 2, kind: input, shape index: {}]
  %s3 = inlined_call_operand.vmem [shape: f32[8,1], index: 3, kind: output, shape index: {}]
  %s4 = sld [smem:[#allocation0]]
  $region34: #{tpu_custom_call.1} parent=0
    _
  %s6 = ssub.s32 1, %s4
  %s7 = scalar_select 0, %s6, %s4
  $region1: #{tpu_custom_call.1} parent=0
    #allocation2 [shape = 'u8[4096]{0}', space=vmem, size = 0x1000, scoped, tag = 'input window, operand 0, single buffered']
    #allocation3 [shape = 's32[1]{0}', space=sflag, size = 0x4, scoped, tag = 'scoped memory for tpu_custom_call.1']
    #allocation4 [shape = 'u8[12288]{0}', space=vmem, size = 0x3000, scoped, tag = 'input window, operand 1, single buffered']
    #allocation5 [shape = 's32[1]{0}', space=sflag, size = 0x4, scoped, tag = 'scoped memory for tpu_custom_call.1']
    #allocation6 [shape = 'u8[2048]{0}', space=vmem, size = 0x800, scoped, tag = 'input window, operand 2, single buffered']
    %8 = vsyncpa [#allocation3], 0
    %9 = vsyncpa [#allocation5], 0
    // Predicated region
    $region2: #{tpu_custom_call.1} parent=1 // pred_check
      _
    $region3: #{tpu_custom_call.1} parent=1 // pred_check_branch
      %11 = sbr.rel (0) target = $region5
    $region4: #{tpu_custom_call.1} parent=1 // pred_region
      %s13 = ssub.s32 128, 128
      %14 = vsyncadd [#allocation3], %s13
      %s16 = sshll.u32 [#allocation2], 4
      %s17 = int_to_ptr.vmem [resolvable:$true] %s16
      %19 = dma.hbm_to_vmem [thread:$0]  %s0, 128, %s17, [#allocation3]
    $region5: #{tpu_custom_call.1} parent=1 // pred_fallthru
      _
    // Predicated region
    $region6: #{tpu_custom_call.1} parent=1 // pred_check
      _
    $region7: #{tpu_custom_call.1} parent=1 // pred_check_branch
      %21 = sbr.rel (0) target = $region9
    $region8: #{tpu_custom_call.1} parent=1 // pred_region
      %s23 = ssub.s32 384, 384
      %24 = vsyncadd [#allocation5], %s23
      %s25 = sshll.u32 [#allocation4], 4
      %s26 = int_to_ptr.vmem [resolvable:$true] %s25
      %31 = dma.hbm_to_vmem [thread:$0]  %s1, 384, %s26, [#allocation5], 128, 128, 8
    $region9: #{tpu_custom_call.1} parent=1 // pred_fallthru
      _
    // Predicated region
    $region10: #{tpu_custom_call.1} parent=1 // pred_check
      _
    $region11: #{tpu_custom_call.1} parent=1 // pred_check_branch
      %33 = sbr.rel (0) target = $region13
    $region12: #{tpu_custom_call.1} parent=1 // pred_region
      %s35 = ssub.s32 64, 64
      %36 = vsyncadd [#allocation5], %s35
      %s38 = sshll.u32 [#allocation6], 4
      %s39 = int_to_ptr.vmem [resolvable:$true] %s38
      %41 = dma.hbm_to_vmem [thread:$0]  %s2, 64, %s39, [#allocation5]
    $region13: #{tpu_custom_call.1} parent=1 // pred_fallthru
      _
    // Predicated region
    $region14: #{tpu_custom_call.1} parent=1 // pred_check
      _
    $region15: #{tpu_custom_call.1} parent=1 // pred_check_branch
      %43 = sbr.rel (0) target = $region17
    $region16: #{tpu_custom_call.1} parent=1 // pred_region
      %44 = dma.done [#allocation3], 128
    $region17: #{tpu_custom_call.1} parent=1 // pred_fallthru
      _
    // Predicated region
    $region18: #{tpu_custom_call.1} parent=1 // pred_check
      _
    $region19: #{tpu_custom_call.1} parent=1 // pred_check_branch
      %46 = sbr.rel (0) target = $region21
    $region20: #{tpu_custom_call.1} parent=1 // pred_region
      %47 = dma.done [#allocation5], 384
    $region21: #{tpu_custom_call.1} parent=1 // pred_fallthru
      _
    // Predicated region
    $region22: #{tpu_custom_call.1} parent=1 // pred_check
      _
    $region23: #{tpu_custom_call.1} parent=1 // pred_check_branch
      %49 = sbr.rel (0) target = $region25
    $region24: #{tpu_custom_call.1} parent=1 // pred_region
      %50 = dma.done [#allocation5], 64
    $region25: #{tpu_custom_call.1} parent=1 // pred_fallthru
      _
    %v51 = vld [vmem:[#allocation2] sm:$0xff]
    %v52 = vld [vmem:[#allocation4] sm:$0xff]
    %v53 = vld [vmem:[#allocation4 + $0x8] sm:$0xff]
    %v54 = vld [vmem:[#allocation4 + $0x10] sm:$0xf]
    %v55 = vld [vmem:[#allocation6] sm:$0x7]
    %v56 = vlaneseq
    %v57 = vshrl.u32 %v56, 7
    %v58 = vsub.s32 0, %v57
    %v59 = vrot.slane %v55, %v58
    %vm60 = vcmask 162816
    %v62 = vsel %vm60, %v51, 0
    %vm64 = vcmask 1043456
    %v66 = vsel %vm64, %v54, 0
    %68 = vmatprep.subr.mxu0 0.0
    %69 = vmatpush1.msra.mxu0 0.0
    %70 = vmatprep.subr.mxu0 0.0
    %71 = vmatpush1.msra.mxu0 0.0
    %72 = vmatprep.subr.mxu0 0.0
    %73 = vmatpush1.msra.mxu0 0.0
    %74 = vmatprep.subr.mxu0 0.0
    %75 = vmatpush1.msra.mxu0 0.0
    %76 = vmatprep.subr.mxu0 0.0
    %77 = vmatpush1.msra.mxu0 0.0
    %78 = vmatprep.subr.mxu0 0.0
    %79 = vmatpush1.msra.mxu0 0.0
    %80 = vmatprep.subr.mxu0 0.0
    %81 = vmatpush1.msra.mxu0 0.0
    %82 = vmatprep.subr.mxu0 0.0
    %83 = vmatpush1.msra.mxu0 0.0
    %84 = vmatprep.subr.mxu0 0.0
    %85 = vmatpush1.msra.mxu0 0.0
    %86 = vmatprep.subr.mxu0 0.0
    %87 = vmatpush1.msra.mxu0 0.0
    %88 = vmatprep.subr.mxu0 0.0
    %89 = vmatpush1.msra.mxu0 0.0
    %90 = vmatprep.subr.mxu0 0.0
    %91 = vmatpush1.msra.mxu0 0.0
    %92 = vmatprep.subr.mxu0 0.0
    %93 = vmatpush1.msra.mxu0 0.0
    %94 = vmatprep.subr.mxu0 0.0
    %95 = vmatpush1.msra.mxu0 %v66
    %96 = vmatprep.subr.mxu0 0.0
    %97 = vmatpush1.msra.mxu0 %v53
    %98 = vmatprep.subr.mxu0 0.0
    %99 = vmatpush1.msra.mxu0 %v52
    %100 = vmatprep.subr.mxu0 0.0
    %101 = vmatpush2.msra.mxu0 0.0
    %102 = vmatprep.subr.mxu0 0.0
    %103 = vmatpush2.msra.mxu0 0.0
    %104 = vmatprep.subr.mxu0 0.0
    %105 = vmatpush2.msra.mxu0 0.0
    %106 = vmatprep.subr.mxu0 0.0
    %107 = vmatpush2.msra.mxu0 0.0
    %108 = vmatprep.subr.mxu0 0.0
    %109 = vmatpush2.msra.mxu0 0.0
    %110 = vmatprep.subr.mxu0 0.0
    %111 = vmatpush2.msra.mxu0 0.0
    %112 = vmatprep.subr.mxu0 0.0
    %113 = vmatpush2.msra.mxu0 0.0
    %114 = vmatprep.subr.mxu0 0.0
    %115 = vmatpush2.msra.mxu0 0.0
    %116 = vmatprep.subr.mxu0 0.0
    %117 = vmatpush2.msra.mxu0 0.0
    %118 = vmatprep.subr.mxu0 0.0
    %119 = vmatpush2.msra.mxu0 0.0
    %120 = vmatprep.subr.mxu0 0.0
    %121 = vmatpush2.msra.mxu0 0.0
    %122 = vmatprep.subr.mxu0 0.0
    %123 = vmatpush2.msra.mxu0 0.0
    %124 = vmatprep.subr.mxu0 0.0
    %125 = vmatpush2.msra.mxu0 0.0
    %126 = vmatprep.subr.mxu0 0.0
    %127 = vmatpush2.msra.mxu0 0.0
    %128 = vmatprep.subr.mxu0 0.0
    %129 = vmatpush2.msra.mxu0 0.0
    %130 = vmatprep.subr.mxu0 0.0
    %131 = vmatpush2.msra.mxu0 0.0
    %132 = vmatprep.mubr.f32.mxu0 0.0
    %133 = vmatmul.mubr.f32.gmra.mxu0 %v62
    %v134 = vpop.f32.mrf.mxu0
    %v135 = vadd.f32 %v59, %v134
    %v136 = vpop.f32.mrf.mxu0
    %137 = vdwg.mxu0
    %v138 = vmax.f32 %v135, 0.0
    %v139 = vlaneseq
    %v140 = vshrl.u32 %v139, 7
    %v141 = vsub.s32 1, %v140
    %v142 = vrot.slane %v55, %v141
    %v143 = vmul.f32 %v138, %v142
    %vm144 = vcmask 244736
    %v145 = vsel %vm144, %v143, 0.0
    %146 = vadd.xlane.f32.xlu0 %v145
    %v147 = vpop.xlane.xlu0 %146
    %v148 = vlaneseq
    %v149 = vshrl.u32 %v148, 7
    %v150 = vsub.s32 2, %v149
    %v151 = vrot.slane %v55, %v150
    %v152 = vadd.f32 %v147, %v151
    %vm153 = vcmask 7168
    %154 = vst.msk [vmem:[%s3] sm:$0xff] %vm153, %v152
    // Predicated region
    $region26: #{tpu_custom_call.1} parent=1 // pred_check
      _
    $region27: #{tpu_custom_call.1} parent=1 // pred_check_branch
      %156 = sbr.rel (0) target = $region29
    $region28: #{tpu_custom_call.1} parent=1 // pred_region
      _
    $region29: #{tpu_custom_call.1} parent=1 // pred_fallthru
      _
    // Predicated region
    $region30: #{tpu_custom_call.1} parent=1 // pred_check
      _
    $region31: #{tpu_custom_call.1} parent=1 // pred_check_branch
      %158 = sbr.rel (0) target = $region33
    $region32: #{tpu_custom_call.1} parent=1 // pred_region
      _
    $region33: #{tpu_custom_call.1} parent=1 // pred_fallthru
      _
    %159 = vsyncpa [#allocation3], 1
    %160 = vsyncpa [#allocation5], 1

</llo_original>
